<compile_context>
chip_gen: v7x
topology: tpu7x:2x2x1
jax: 0.10.0
libtpu: 0.0.40
codegen_flags: <defaults>
</compile_context>

<pallas_src>
import jax
import jax.numpy as jnp
from jax.experimental import pallas as pl
from jax.experimental.pallas import tpu as pltpu


def _round_up(x, m):
    return (x + m - 1) // m * m


def _vmem_capacity_bytes():
    try:
        return int(pltpu.get_tpu_info().vmem_capacity_bytes)
    except Exception:
        return 64 * 1024 * 1024        # conservative fallback (v7x per-TC VMEM)


def ffn_kernel(x_ref, w1_ref, b1_ref, w2_ref, b2_ref, o_ref):
    # x_ref: (tile_m, Dp) bf16   w1/w2: (Dp, Dp) bf16   b1/b2: (1, Dp) f32
    h = jnp.dot(x_ref[...], w1_ref[...], preferred_element_type=jnp.float32)
    h = jnp.maximum(h + b1_ref[...], 0.0)                      # f32 epilogue (VPU)
    y = jnp.dot(h.astype(jnp.bfloat16), w2_ref[...],
                preferred_element_type=jnp.float32)
    o_ref[...] = (y + b2_ref[...]).astype(o_ref.dtype)


def prepare_ffn_params(w1, b1, w2, b2):
    """Pad params to a lane-dense Dp (multiple of 128) and cast weights to
    bf16.  Call ONCE and reuse -- keeps the per-call hot path clean."""
    D = w1.shape[0]
    Dp = _round_up(D, 128)

    def pad_w(w):
        if Dp != D:
            w = jnp.pad(w, ((0, Dp - D), (0, Dp - D)))
        return w.astype(jnp.bfloat16)          # half HBM bytes + VMEM residency

    def pad_b(b):
        if Dp != D:
            b = jnp.pad(b, (0, Dp - D))
        return b.reshape(1, Dp).astype(jnp.float32)

    return pad_w(w1), pad_b(b1), pad_w(w2), pad_b(b2)


def feed_forward_block(x, w1p, b1p, w2p, b2p, *, block_m=1024, out_dtype=None):
    """x: (B, S, D).  w1p/b1p/w2p/b2p: output of prepare_ffn_params()."""
    B, S, D = x.shape
    M = B * S
    Dp = w1p.shape[0]
    out_dtype = x.dtype if out_dtype is None else out_dtype
    out_bytes = jnp.dtype(out_dtype).itemsize

    # ---- generation-aware sizing ------------------------------------------
    vmem_cap = _vmem_capacity_bytes()
    budget = int(vmem_cap * 0.75)

    # Resident bf16 weights (single copy) + f32 biases.
    fixed_bytes = 2 * Dp * Dp * 2 + 2 * Dp * 4

    def tile_bytes(tm, x_bufs):
        return (x_bufs * tm * Dp * 2           # bf16 x tile buffers
                + 2 * tm * Dp * out_bytes      # double-buffered out tiles
                + 2 * tm * Dp * 4)             # f32 intermediates headroom

    # Don't inflate tiny M: round rows up only to the bf16 sublane pack (16).
    tile_m = max(16, min(block_m, _round_up(M, 16)))
    tile_m = _round_up(tile_m, 16)
    while tile_m > 16 and fixed_bytes + tile_bytes(tile_m, 2) > budget:
        tile_m = max(16, _round_up(tile_m // 2, 16))

    Mp = _round_up(M, tile_m)
    num_tiles = Mp // tile_m

    # Deepen x pipelining only when per-tile compute is short (small Dp), the
    # grid is long enough to benefit, and VMEM headroom exists.
    x_bufs = 2
    if (Dp <= 512 and num_tiles >= 3
            and fixed_bytes + tile_bytes(tile_m, 3) <= budget):
        x_bufs = 3

    need = fixed_bytes + tile_bytes(tile_m, x_bufs)
    vmem_limit = int(min(max(2 * need, 32 * 1024 * 1024), vmem_cap * 0.9))

    # Single-buffer the resident weights/biases when the second copy would
    # actually cost meaningful VMEM (always true at production Dp).
    big_weights = (2 * Dp * Dp * 2) >= (4 << 20)
    resident_kwargs = dict(pipeline_mode=pl.Buffered(1)) if big_weights else {}
    x_kwargs = dict(pipeline_mode=pl.Buffered(x_bufs)) if x_bufs != 2 else {}

    # ---- activations: pad + bf16 cast fused, done once here ---------------
    x2d = x.reshape(M, D)
    if (Mp, Dp) != (M, D):
        x2d = jnp.pad(x2d, ((0, Mp - M), (0, Dp - D)))
    x2d = x2d.astype(jnp.bfloat16)

    cost = pl.CostEstimate(
        flops=4 * Mp * Dp * Dp,                       # two Mp x Dp x Dp matmuls
        transcendentals=0,
        bytes_accessed=(2 * Dp * Dp * 2               # bf16 weights
                        + Mp * Dp * 2                 # bf16 x in
                        + Mp * Dp * out_bytes         # out
                        + 2 * Dp * 4),                # biases
    )

    out2d = pl.pallas_call(
        ffn_kernel,
        out_shape=jax.ShapeDtypeStruct((Mp, Dp), out_dtype),
        grid_spec=pltpu.PrefetchScalarGridSpec(
            num_scalar_prefetch=0,
            grid=(num_tiles,),
            in_specs=[
                pl.BlockSpec((tile_m, Dp), lambda i: (i, 0), **x_kwargs),
                pl.BlockSpec((Dp, Dp), lambda i: (0, 0), **resident_kwargs),
                pl.BlockSpec((1, Dp), lambda i: (0, 0), **resident_kwargs),
                pl.BlockSpec((Dp, Dp), lambda i: (0, 0), **resident_kwargs),
                pl.BlockSpec((1, Dp), lambda i: (0, 0), **resident_kwargs),
            ],
            out_specs=pl.BlockSpec((tile_m, Dp), lambda i: (i, 0)),
        ),
        compiler_params=pltpu.CompilerParams(
            # Independent M tiles -> shard across TensorCores on v7x.
            dimension_semantics=("parallel",),
            vmem_limit_bytes=vmem_limit,
        ),
        cost_estimate=cost,
    )(x2d, w1p, b1p, w2p, b2p)

    return out2d[:M, :D].reshape(B, S, D)


def init_params(key, dim_ff):
    """Deterministic synthetic params mimicking nn.Linear(dim_ff, dim_ff).

    PyTorch stores weight as (out, in) and computes x @ W^T + b; we keep the
    mathematically-equivalent transposed layout (in, out) for the kernel.
    """
    k1, k2, k3, k4 = jax.random.split(key, 4)
    bound = 1.0 / (dim_ff ** 0.5)
    w1 = jax.random.uniform(k1, (dim_ff, dim_ff), jnp.float32, -bound, bound)
    b1 = jax.random.uniform(k2, (dim_ff,), jnp.float32, -bound, bound)
    w2 = jax.random.uniform(k3, (dim_ff, dim_ff), jnp.float32, -bound, bound)
    b2 = jax.random.uniform(k4, (dim_ff,), jnp.float32, -bound, bound)
    return w1, b1, w2, b2


if __name__ == "__main__":
    batch, seq, dim_ff = 2, 8, 32

    key = jax.random.PRNGKey(0)
    kx, kp = jax.random.split(key)
    x = jax.random.normal(kx, (batch, seq, dim_ff), jnp.float32)
    w1, b1, w2, b2 = init_params(kp, dim_ff)

    # Prepare (pad + bf16-cast) params ONCE, outside the hot path.
    params = prepare_ffn_params(w1, b1, w2, b2)
    params = jax.block_until_ready(params)

    fwd = jax.jit(feed_forward_block)
    out = fwd(x, *params)
    out = jax.block_until_ready(out)

    # Pure-JAX f32 reference (same math as the PyTorch module). Kernel matmuls
    # run bf16 with f32 accumulation, so compare with a bf16-appropriate tol.
    ref = jnp.maximum(x @ w1 + b1, 0.0) @ w2 + b2
    assert out.shape == (batch, seq, dim_ff)
    assert jnp.allclose(out, ref, atol=3e-2, rtol=3e-2), (
        "max abs diff = %f" % float(jnp.max(jnp.abs(out - ref))))

    print("KERNEL_OK")
</pallas_src>

<mosaic_0001>
module attributes {stable_mosaic.version = 11 : i64} {
  func.func @ffn_kernel(%arg0: i32, %arg1: memref<16x128xbf16, #tpu.memory_space<vmem>>, %arg2: memref<128x128xbf16, #tpu.memory_space<vmem>>, %arg3: memref<1x128xf32, #tpu.memory_space<vmem>>, %arg4: memref<128x128xbf16, #tpu.memory_space<vmem>>, %arg5: memref<1x128xf32, #tpu.memory_space<vmem>>, %arg6: memref<16x128xf32, #tpu.memory_space<vmem>>) attributes {dimension_semantics = [#tpu.dimension_semantics<parallel>], iteration_bounds = array<i64: 1>, scalar_prefetch = 0 : i64, scratch_operands = 0 : i64, tpu.core_type = #tpu.core_type<tc>, window_params = [{transform_indices = @transform_0, window_bounds = array<i64: 16, 128>}, {pipeline_mode = #tpu.pipeline_mode<synchronous>, transform_indices = @transform_1, window_bounds = array<i64: 128, 128>}, {pipeline_mode = #tpu.pipeline_mode<synchronous>, transform_indices = @transform_2, window_bounds = array<i64: 1, 128>}, {pipeline_mode = #tpu.pipeline_mode<synchronous>, transform_indices = @transform_3, window_bounds = array<i64: 128, 128>}, {pipeline_mode = #tpu.pipeline_mode<synchronous>, transform_indices = @transform_4, window_bounds = array<i64: 1, 128>}, {transform_indices = @transform_5, window_bounds = array<i64: 16, 128>}]} {
    %c0 = arith.constant 0 : index
    %c0_0 = arith.constant 0 : index
    %0 = vector.load %arg1[%c0, %c0_0] : memref<16x128xbf16, #tpu.memory_space<vmem>>, vector<16x128xbf16>
    %c0_1 = arith.constant 0 : index
    %c0_2 = arith.constant 0 : index
    %1 = vector.load %arg2[%c0_1, %c0_2] : memref<128x128xbf16, #tpu.memory_space<vmem>>, vector<128x128xbf16>
    %cst = arith.constant dense<0.000000e+00> : vector<16x128xf32>
    %2 = tpu.matmul %0, %1, %cst {dimension_numbers = #tpu.dot_dimension_numbers<[1], [0], [0], [1], [0, 0, 1, 1], [], []>} : vector<16x128xbf16>, vector<128x128xbf16>, vector<16x128xf32> -> vector<16x128xf32>
    %c0_3 = arith.constant 0 : index
    %c0_4 = arith.constant 0 : index
    %3 = vector.load %arg3[%c0_3, %c0_4] : memref<1x128xf32, #tpu.memory_space<vmem>>, vector<1x128xf32>
    %4 = vector.broadcast %3 : vector<1x128xf32> to vector<16x128xf32>
    %5 = arith.addf %2, %4 : vector<16x128xf32>
    %cst_5 = arith.constant 0.000000e+00 : f32
    %6 = vector.broadcast %cst_5 : f32 to vector<16x128xf32>
    %7 = arith.maximumf %5, %6 : vector<16x128xf32>
    %8 = arith.truncf %7 : vector<16x128xf32> to vector<16x128xbf16>
    %c0_6 = arith.constant 0 : index
    %c0_7 = arith.constant 0 : index
    %9 = vector.load %arg4[%c0_6, %c0_7] : memref<128x128xbf16, #tpu.memory_space<vmem>>, vector<128x128xbf16>
    %cst_8 = arith.constant dense<0.000000e+00> : vector<16x128xf32>
    %10 = tpu.matmul %8, %9, %cst_8 {dimension_numbers = #tpu.dot_dimension_numbers<[1], [0], [0], [1], [0, 0, 1, 1], [], []>} : vector<16x128xbf16>, vector<128x128xbf16>, vector<16x128xf32> -> vector<16x128xf32>
    %c0_9 = arith.constant 0 : index
    %c0_10 = arith.constant 0 : index
    %11 = vector.load %arg5[%c0_9, %c0_10] : memref<1x128xf32, #tpu.memory_space<vmem>>, vector<1x128xf32>
    %12 = vector.broadcast %11 : vector<1x128xf32> to vector<16x128xf32>
    %13 = arith.addf %10, %12 : vector<16x128xf32>
    %c0_11 = arith.constant 0 : index
    %c0_12 = arith.constant 0 : index
    %14 = vector.load %arg6[%c0_11, %c0_12] : memref<16x128xf32, #tpu.memory_space<vmem>>, vector<16x128xf32>
    tpu.vector_store %arg6[%c0_11, %c0_12], %13 {strides = array<i32>} : memref<16x128xf32, #tpu.memory_space<vmem>>, vector<16x128xf32>,
    return
  }
  func.func @transform_0(%arg0: i32) -> (i32, i32) {
    %c0_i32 = arith.constant 0 : i32
    %c0_i32_0 = arith.constant 0 : i32
    return %arg0, %c0_i32 : i32, i32
  }
  func.func @transform_1(%arg0: i32) -> (i32, i32) {
    %c0_i32 = arith.constant 0 : i32
    %c0_i32_0 = arith.constant 0 : i32
    %c0_i32_1 = arith.constant 0 : i32
    return %c0_i32, %c0_i32_0 : i32, i32
  }
  func.func @transform_2(%arg0: i32) -> (i32, i32) {
    %c0_i32 = arith.constant 0 : i32
    %c0_i32_0 = arith.constant 0 : i32
    %c0_i32_1 = arith.constant 0 : i32
    return %c0_i32, %c0_i32_0 : i32, i32
  }
  func.func @transform_3(%arg0: i32) -> (i32, i32) {
    %c0_i32 = arith.constant 0 : i32
    %c0_i32_0 = arith.constant 0 : i32
    %c0_i32_1 = arith.constant 0 : i32
    return %c0_i32, %c0_i32_0 : i32, i32
  }
  func.func @transform_4(%arg0: i32) -> (i32, i32) {
    %c0_i32 = arith.constant 0 : i32
    %c0_i32_0 = arith.constant 0 : i32
    %c0_i32_1 = arith.constant 0 : i32
    return %c0_i32, %c0_i32_0 : i32, i32
  }
  func.func @transform_5(%arg0: i32) -> (i32, i32) {
    %c0_i32 = arith.constant 0 : i32
    %c0_i32_0 = arith.constant 0 : i32
    return %arg0, %c0_i32 : i32, i32
  }
}

</mosaic_0001>

<llo_original>
// kernel: feed_forward_block.1
$region0: #{feed_forward_block.1}
  #allocation0 [shape = 'u32[]', space=smem, size = 0x4, offset = 0x4, fixed_abs, tag = 'smem constant byte address 0x4 - core index']
  #allocation1 [shape = 'u32[144,128]{1,0:T(1,128)}', space=vmem, size = 0x12000, scoped, tag = 'internal scratch']
  %s0 = inlined_call_operand.vmem [shape: bf16[16,128], index: 0, kind: input, shape index: {}]
  %s1 = inlined_call_operand.hbm [shape: bf16[128,128], index: 1, kind: input, shape index: {}]
  %s2 = inlined_call_operand.vmem [shape: f32[1,128], index: 2, kind: input, shape index: {}]
  %s3 = inlined_call_operand.hbm [shape: bf16[128,128], index: 3, kind: input, shape index: {}]
  %s4 = inlined_call_operand.vmem [shape: f32[1,128], index: 4, kind: input, shape index: {}]
  %s5 = inlined_call_operand.vmem [shape: f32[16,128], index: 5, kind: output, shape index: {}]
  %s6 = sld [smem:[#allocation0]]
  $region38: #{feed_forward_block.1} parent=0
    _
  %s8 = ssub.s32 1, %s6
  %s9 = scalar_select 0, %s8, %s6
  $region1: #{feed_forward_block.1} parent=0
    #allocation2 [shape = 'u8[32768]{0}', space=vmem, size = 0x8000, scoped, tag = 'input window, operand 1, single buffered']
    #allocation3 [shape = 's32[1]{0}', space=sflag, size = 0x4, scoped, tag = 'scoped memory for feed_forward_block.1']
    #allocation4 [shape = 'u8[32768]{0}', space=vmem, size = 0x8000, scoped, tag = 'input window, operand 3, single buffered']
    #allocation5 [shape = 's32[1]{0}', space=sflag, size = 0x4, scoped, tag = 'scoped memory for feed_forward_block.1']
    %10 = vsyncpa [#allocation3], 0
    %11 = vsyncpa [#allocation5], 0
    // Predicated region
    $region2: #{feed_forward_block.1} parent=1 // pred_check
      _
    $region3: #{feed_forward_block.1} parent=1 // pred_check_branch
      %13 = sbr.rel (0) target = $region5
    $region4: #{feed_forward_block.1} parent=1 // pred_region
      _
    $region5: #{feed_forward_block.1} parent=1 // pred_fallthru
      _
    // Predicated region
    $region6: #{feed_forward_block.1} parent=1 // pred_check
      _
    $region7: #{feed_forward_block.1} parent=1 // pred_check_branch
      %15 = sbr.rel (0) target = $region9
    $region8: #{feed_forward_block.1} parent=1 // pred_region
      %s17 = ssub.s32 1024, 1024
      %18 = vsyncadd [#allocation3], %s17
      %s19 = sshll.u32 [#allocation2], 4
      %s20 = int_to_ptr.vmem [resolvable:$true] %s19
      %25 = dma.hbm_to_vmem [thread:$0]  %s1, 1024, %s20, [#allocation3], 64, 64, 4
    $region9: #{feed_forward_block.1} parent=1 // pred_fallthru
      _
    // Predicated region
    $region10: #{feed_forward_block.1} parent=1 // pred_check
      _
    $region11: #{feed_forward_block.1} parent=1 // pred_check_branch
      %27 = sbr.rel (0) target = $region13
    $region12: #{feed_forward_block.1} parent=1 // pred_region
      _
    $region13: #{feed_forward_block.1} parent=1 // pred_fallthru
      _
    // Predicated region
    $region14: #{feed_forward_block.1} parent=1 // pred_check
      _
    $region15: #{feed_forward_block.1} parent=1 // pred_check_branch
      %29 = sbr.rel (0) target = $region17
    $region16: #{feed_forward_block.1} parent=1 // pred_region
      %s31 = ssub.s32 1024, 1024
      %32 = vsyncadd [#allocation5], %s31
      %s33 = sshll.u32 [#allocation4], 4
      %s34 = int_to_ptr.vmem [resolvable:$true] %s33
      %39 = dma.hbm_to_vmem [thread:$0]  %s3, 1024, %s34, [#allocation5], 64, 64, 4
    $region17: #{feed_forward_block.1} parent=1 // pred_fallthru
      _
    // Predicated region
    $region18: #{feed_forward_block.1} parent=1 // pred_check
      _
    $region19: #{feed_forward_block.1} parent=1 // pred_check_branch
      %41 = sbr.rel (0) target = $region21
    $region20: #{feed_forward_block.1} parent=1 // pred_region
      _
    $region21: #{feed_forward_block.1} parent=1 // pred_fallthru
      _
    // Predicated region
    $region22: #{feed_forward_block.1} parent=1 // pred_check
      _
    $region23: #{feed_forward_block.1} parent=1 // pred_check_branch
      %43 = sbr.rel (0) target = $region25
    $region24: #{feed_forward_block.1} parent=1 // pred_region
      %44 = dma.done [#allocation3], 1024
    $region25: #{feed_forward_block.1} parent=1 // pred_fallthru
      _
    // Predicated region
    $region26: #{feed_forward_block.1} parent=1 // pred_check
      _
    $region27: #{feed_forward_block.1} parent=1 // pred_check_branch
      %46 = sbr.rel (0) target = $region29
    $region28: #{feed_forward_block.1} parent=1 // pred_region
      %47 = dma.done [#allocation5], 1024
    $region29: #{feed_forward_block.1} parent=1 // pred_fallthru
      _
    %v49 = vld [vmem:[%s0] sm:$0xf]
    %v50 = vld [vmem:[%s0 + $0x4] sm:$0xf]
    %v51 = vld [vmem:[#allocation2] sm:$0xf]
    %v52 = vld [vmem:[#allocation2 + $0x4] sm:$0xf]
    %v53 = vld [vmem:[#allocation2 + $0x8] sm:$0xf]
    %v54 = vld [vmem:[#allocation2 + $0xc] sm:$0xf]
    %v55 = vld [vmem:[#allocation2 + $0x10] sm:$0xf]
    %v56 = vld [vmem:[#allocation2 + $0x14] sm:$0xf]
    %v57 = vld [vmem:[#allocation2 + $0x18] sm:$0xf]
    %v58 = vld [vmem:[#allocation2 + $0x1c] sm:$0xf]
    %v59 = vld [vmem:[#allocation2 + $0x20] sm:$0xf]
    %v60 = vld [vmem:[#allocation2 + $0x24] sm:$0xf]
    %v61 = vld [vmem:[#allocation2 + $0x28] sm:$0xf]
    %v62 = vld [vmem:[#allocation2 + $0x2c] sm:$0xf]
    %v63 = vld [vmem:[#allocation2 + $0x30] sm:$0xf]
    %v64 = vld [vmem:[#allocation2 + $0x34] sm:$0xf]
    %v65 = vld [vmem:[#allocation2 + $0x38] sm:$0xf]
    %v66 = vld [vmem:[#allocation2 + $0x3c] sm:$0xf]
    %v67 = vld [vmem:[%s2] sm:$0x1]
    %v69 = vlaneseq
    %v70 = vshrl.u32 %v69, 7
    %v71 = vsub.s32 0, %v70
    %v72 = vrot.slane %v67, %v71
    %v76 = vunpack.c.l.b16 %v49
    %v77 = vunpack.c.l.b16 %v50
    %v78 = vpack.c.b16 %v77, %v76
    %v96 = vunpack.c.l.b16 %v51
    %v97 = vunpack.c.l.b16 %v52
    %v98 = vunpack.c.l.b16 %v53
    %v99 = vunpack.c.l.b16 %v54
    %v100 = vunpack.c.l.b16 %v55
    %v101 = vunpack.c.l.b16 %v56
    %v102 = vunpack.c.l.b16 %v57
    %v103 = vunpack.c.l.b16 %v58
    %v104 = vunpack.c.l.b16 %v59
    %v105 = vunpack.c.l.b16 %v60
    %v106 = vunpack.c.l.b16 %v61
    %v107 = vunpack.c.l.b16 %v62
    %v108 = vunpack.c.l.b16 %v63
    %v109 = vunpack.c.l.b16 %v64
    %v110 = vunpack.c.l.b16 %v65
    %v111 = vunpack.c.l.b16 %v66
    %v112 = vpack.c.b16 %v97, %v96
    %v113 = vpack.c.b16 %v99, %v98
    %v114 = vpack.c.b16 %v101, %v100
    %v115 = vpack.c.b16 %v103, %v102
    %v116 = vpack.c.b16 %v105, %v104
    %v117 = vpack.c.b16 %v107, %v106
    %v118 = vpack.c.b16 %v109, %v108
    %v119 = vpack.c.b16 %v111, %v110
    %128 = vmatprep.subr.bf16.mxu0 0
    %129 = vmatpush1.bf16.msra.mxu0 %v112
    %130 = vmatprep.subr.bf16.mxu0 0
    %131 = vmatpush1.bf16.msra.mxu0 %v113
    %132 = vmatprep.subr.bf16.mxu0 0
    %133 = vmatpush1.bf16.msra.mxu0 %v114
    %134 = vmatprep.subr.bf16.mxu0 0
    %135 = vmatpush1.bf16.msra.mxu0 %v115
    %136 = vmatprep.subr.bf16.mxu0 0
    %137 = vmatpush1.bf16.msra.mxu0 %v116
    %138 = vmatprep.subr.bf16.mxu0 0
    %139 = vmatpush1.bf16.msra.mxu0 %v117
    %140 = vmatprep.subr.bf16.mxu0 0
    %141 = vmatpush1.bf16.msra.mxu0 %v118
    %142 = vmatprep.subr.bf16.mxu0 0
    %143 = vmatpush1.bf16.msra.mxu0 %v119
    %144 = vmatprep.subr.bf16.mxu0 0
    %145 = vmatpush1.bf16.msra.mxu0 0
    %146 = vmatprep.subr.bf16.mxu0 0
    %147 = vmatpush1.bf16.msra.mxu0 0
    %148 = vmatprep.subr.bf16.mxu0 0
    %149 = vmatpush1.bf16.msra.mxu0 0
    %150 = vmatprep.subr.bf16.mxu0 0
    %151 = vmatpush1.bf16.msra.mxu0 0
    %152 = vmatprep.subr.bf16.mxu0 0
    %153 = vmatpush1.bf16.msra.mxu0 0
    %154 = vmatprep.subr.bf16.mxu0 0
    %155 = vmatpush1.bf16.msra.mxu0 0
    %156 = vmatprep.subr.bf16.mxu0 0
    %157 = vmatpush1.bf16.msra.mxu0 0
    %158 = vmatprep.subr.bf16.mxu0 0
    %159 = vmatpush1.bf16.msra.mxu0 0
    %160 = vmatprep.mubr.bf16.mxu0 0
    %161 = vmatmul.mubr.bf16.gmra.mrb[0].mxu0 %v78
    %v162 = vpop.f32.mrb[0].mxu0
    %v163 = vadd.f32 %v72, %v162
    %v164 = vpop.f32.mrb[0].mxu0
    %v165 = vpop.f32.mrb[0].mxu0
    %v166 = vadd.f32 %v72, %v165
    %v167 = vpop.f32.mrb[0].mxu0
    %168 = vdwg.mxu0
    %v169 = vmax.f32 %v163, 0.0
    %v170 = vmax.f32 %v166, 0.0
    %v171 = vpack.c.bf16 %v170, %v169
    %v172 = vld [vmem:[#allocation4] sm:$0xf]
    %v173 = vld [vmem:[#allocation4 + $0x4] sm:$0xf]
    %v174 = vld [vmem:[#allocation4 + $0x8] sm:$0xf]
    %v175 = vld [vmem:[#allocation4 + $0xc] sm:$0xf]
    %v176 = vld [vmem:[#allocation4 + $0x10] sm:$0xf]
    %v177 = vld [vmem:[#allocation4 + $0x14] sm:$0xf]
    %v178 = vld [vmem:[#allocation4 + $0x18] sm:$0xf]
    %v179 = vld [vmem:[#allocation4 + $0x1c] sm:$0xf]
    %v180 = vld [vmem:[#allocation4 + $0x20] sm:$0xf]
    %v181 = vld [vmem:[#allocation4 + $0x24] sm:$0xf]
    %v182 = vld [vmem:[#allocation4 + $0x28] sm:$0xf]
    %v183 = vld [vmem:[#allocation4 + $0x2c] sm:$0xf]
    %v184 = vld [vmem:[#allocation4 + $0x30] sm:$0xf]
    %v185 = vld [vmem:[#allocation4 + $0x34] sm:$0xf]
    %v186 = vld [vmem:[#allocation4 + $0x38] sm:$0xf]
    %v187 = vld [vmem:[#allocation4 + $0x3c] sm:$0xf]
    %v188 = vld [vmem:[%s4] sm:$0x1]
    %v190 = vlaneseq
    %v191 = vshrl.u32 %v190, 7
    %v192 = vsub.s32 0, %v191
    %v193 = vrot.slane %v188, %v192
    %v211 = vunpack.c.l.b16 %v172
    %v212 = vunpack.c.l.b16 %v173
    %v213 = vunpack.c.l.b16 %v174
    %v214 = vunpack.c.l.b16 %v175
    %v215 = vunpack.c.l.b16 %v176
    %v216 = vunpack.c.l.b16 %v177
    %v217 = vunpack.c.l.b16 %v178
    %v218 = vunpack.c.l.b16 %v179
    %v219 = vunpack.c.l.b16 %v180
    %v220 = vunpack.c.l.b16 %v181
    %v221 = vunpack.c.l.b16 %v182
    %v222 = vunpack.c.l.b16 %v183
    %v223 = vunpack.c.l.b16 %v184
    %v224 = vunpack.c.l.b16 %v185
    %v225 = vunpack.c.l.b16 %v186
    %v226 = vunpack.c.l.b16 %v187
    %v227 = vpack.c.b16 %v212, %v211
    %v228 = vpack.c.b16 %v214, %v213
    %v229 = vpack.c.b16 %v216, %v215
    %v230 = vpack.c.b16 %v218, %v217
    %v231 = vpack.c.b16 %v220, %v219
    %v232 = vpack.c.b16 %v222, %v221
    %v233 = vpack.c.b16 %v224, %v223
    %v234 = vpack.c.b16 %v226, %v225
    %243 = vmatprep.subr.bf16.mxu0 0
    %244 = vmatpush1.bf16.msra.mxu0 %v227
    %245 = vmatprep.subr.bf16.mxu0 0
    %246 = vmatpush1.bf16.msra.mxu0 %v228
    %247 = vmatprep.subr.bf16.mxu0 0
    %248 = vmatpush1.bf16.msra.mxu0 %v229
    %249 = vmatprep.subr.bf16.mxu0 0
    %250 = vmatpush1.bf16.msra.mxu0 %v230
    %251 = vmatprep.subr.bf16.mxu0 0
    %252 = vmatpush1.bf16.msra.mxu0 %v231
    %253 = vmatprep.subr.bf16.mxu0 0
    %254 = vmatpush1.bf16.msra.mxu0 %v232
    %255 = vmatprep.subr.bf16.mxu0 0
    %256 = vmatpush1.bf16.msra.mxu0 %v233
    %257 = vmatprep.subr.bf16.mxu0 0
    %258 = vmatpush1.bf16.msra.mxu0 %v234
    %259 = vmatprep.subr.bf16.mxu0 0
    %260 = vmatpush1.bf16.msra.mxu0 0
    %261 = vmatprep.subr.bf16.mxu0 0
    %262 = vmatpush1.bf16.msra.mxu0 0
    %263 = vmatprep.subr.bf16.mxu0 0
    %264 = vmatpush1.bf16.msra.mxu0 0
    %265 = vmatprep.subr.bf16.mxu0 0
    %266 = vmatpush1.bf16.msra.mxu0 0
    %267 = vmatprep.subr.bf16.mxu0 0
    %268 = vmatpush1.bf16.msra.mxu0 0
    %269 = vmatprep.subr.bf16.mxu0 0
    %270 = vmatpush1.bf16.msra.mxu0 0
    %271 = vmatprep.subr.bf16.mxu0 0
    %272 = vmatpush1.bf16.msra.mxu0 0
    %273 = vmatprep.subr.bf16.mxu0 0
    %274 = vmatpush1.bf16.msra.mxu0 0
    %275 = vmatprep.mubr.bf16.mxu0 0
    %276 = vmatmul.mubr.bf16.gmra.mrb[0].mxu0 %v171
    %v277 = vpop.f32.mrb[0].mxu0
    %v278 = vadd.f32 %v193, %v277
    %v279 = vpop.f32.mrb[0].mxu0
    %v280 = vpop.f32.mrb[0].mxu0
    %v281 = vadd.f32 %v193, %v280
    %v282 = vpop.f32.mrb[0].mxu0
    %283 = vdwg.mxu0
    %284 = vst [vmem:[%s5] sm:$0xff] %v278
    %285 = vst [vmem:[%s5 + $0x8] sm:$0xff] %v281
    // Predicated region
    $region30: #{feed_forward_block.1} parent=1 // pred_check
      _
    $region31: #{feed_forward_block.1} parent=1 // pred_check_branch
      %287 = sbr.rel (0) target = $region33
    $region32: #{feed_forward_block.1} parent=1 // pred_region
      _
    $region33: #{feed_forward_block.1} parent=1 // pred_fallthru
      _
    // Predicated region
    $region34: #{feed_forward_block.1} parent=1 // pred_check
      _
    $region35: #{feed_forward_block.1} parent=1 // pred_check_branch
      %289 = sbr.rel (0) target = $region37
    $region36: #{feed_forward_block.1} parent=1 // pred_region
      _
    $region37: #{feed_forward_block.1} parent=1 // pred_fallthru
      _
    %290 = vsyncpa [#allocation3], 1
    %291 = vsyncpa [#allocation5], 1

</llo_original>
